<compile_context>
chip_gen: v5e
topology: v5e:2x2
jax: 0.10.0
libtpu: 0.0.40
codegen_flags: <defaults>
</compile_context>

<pallas_src>
import functools
import math

import jax
import jax.numpy as jnp
from jax.experimental import pallas as pl
from jax.experimental.pallas import tpu as pltpu

_SQRT_2_OVER_PI = math.sqrt(2.0 / math.pi)
_C1 = _SQRT_2_OVER_PI
_C2 = _SQRT_2_OVER_PI * 0.044715


def _round_up(n, m):
    return ((n + m - 1) // m) * m


def _gelu_compute_dtype():
    """bf16 elementwise GELU only where the VPU/EUP support it (v6e / v7x)."""
    try:
        kind = jax.devices()[0].device_kind.lower()
    except Exception:
        return jnp.float32
    if "v6" in kind or "v7" in kind:
        return jnp.bfloat16
    return jnp.float32  # v5e (and older) VPU/EUP have no bf16 path


def fused_mlp_kernel(x_ref, w_in_ref, b_in_ref, w_hid_ref, b_hid_ref,
                     w_out_ref, b_out_ref, o_ref, *, n_hid, gelu_dtype):
    """One batch tile of the whole MLP, all layers fused.

    x_ref:     (Bt, Din_p)            bf16 padded input activations
    w_in_ref:  (Din_p, Dh_p)          bf16 first-layer weight
    b_in_ref:  (1, Dh_p)              f32  first-layer bias
    w_hid_ref: (max(n_hid,1), Dh_p, Dh_p)  bf16 stacked hidden->hidden weights
    b_hid_ref: (max(n_hid,1), 1, Dh_p)     f32  stacked hidden->hidden biases
    w_out_ref: (Dh_p, Dout_p)         bf16 last-layer weight
    b_out_ref: (1, Dout_p)            f32  last-layer bias
    o_ref:     (Bt, Dout_p)           f32  padded output

    The module applies its tanh-approx GELU after EVERY layer (including the
    last one) — reproduced exactly.  Activations stay in vregs between layers;
    only the final activation is written back.
    """
    def act(y_f32):
        # gelu(y) = y * (0.5 + 0.5*tanh(y*(c1 + c2*y^2)))  -- constants folded
        y = y_f32.astype(gelu_dtype)
        t = y * y
        g = jnp.tanh(y * (_C1 + _C2 * t))       # EUP tanh slot
        return y * (0.5 + 0.5 * g)

    def layer(h, w, b):
        # bf16 MXU inputs, f32 accumulation; bias add in f32.
        y = jnp.dot(h.astype(jnp.bfloat16), w,
                    preferred_element_type=jnp.float32) + b
        return act(y)

    h = layer(x_ref[...], w_in_ref[...], b_in_ref[...])
    for i in range(n_hid):                      # static unroll; n_hid is small
        h = layer(h, w_hid_ref[i], b_hid_ref[i])
    h = layer(h, w_out_ref[...], b_out_ref[...])
    o_ref[...] = h.astype(o_ref.dtype)


def prepare_packed_params(params):
    """Pad (once, at init time) and pack parameters for the fused kernel.

    params: list of (W, b) with W pre-transposed to (in_features, out_features)
            so y = x @ W + b  (== PyTorch x @ W^T + b).
    Each feature dim is padded independently to a multiple of 128 (lane-dense);
    weights are cast to bf16 (MXU inputs), biases stay f32 (added after the
    f32-accumulated matmul).  Zero padding keeps the valid region exact:
    gelu(0) == 0 and padded weight rows/cols are zero.
    """
    num_layers = len(params)
    assert num_layers >= 2, "DeepNeural always has a first and a last Linear"
    n_inputs, n_hidden = params[0][0].shape
    n_outputs = params[-1][0].shape[1]
    n_hid = num_layers - 2                      # hidden->hidden layer count

    din_p = _round_up(n_inputs, 128)
    dh_p = _round_up(n_hidden, 128)
    dout_p = _round_up(n_outputs, 128)

    def pad2(w, r, c):
        return jnp.zeros((r, c), jnp.float32).at[: w.shape[0], : w.shape[1]].set(w)

    w_in = pad2(params[0][0], din_p, dh_p).astype(jnp.bfloat16)
    b_in = jnp.zeros((1, dh_p), jnp.float32).at[0, :n_hidden].set(params[0][1])

    n_stack = max(n_hid, 1)                     # dummy slot if no hidden layers
    w_hid = jnp.zeros((n_stack, dh_p, dh_p), jnp.float32)
    b_hid = jnp.zeros((n_stack, 1, dh_p), jnp.float32)
    for i in range(n_hid):
        w, b = params[1 + i]
        w_hid = w_hid.at[i, : w.shape[0], : w.shape[1]].set(w)
        b_hid = b_hid.at[i, 0, : b.shape[0]].set(b)
    w_hid = w_hid.astype(jnp.bfloat16)

    w_out = pad2(params[-1][0], dh_p, dout_p).astype(jnp.bfloat16)
    b_out = jnp.zeros((1, dout_p), jnp.float32).at[0, :n_outputs].set(params[-1][1])

    packed = (w_in, b_in, w_hid, b_hid, w_out, b_out)
    meta = {"n_hid": n_hid, "n_inputs": n_inputs, "n_outputs": n_outputs}
    return packed, meta


@functools.partial(jax.jit, static_argnames=("n_hid", "n_outputs"))
def deep_neural_forward(x, w_in, b_in, w_hid, b_hid, w_out, b_out, *,
                        n_hid, n_outputs):
    """Forward pass of DeepNeural: x (batch, n_inputs) f32 -> (batch, n_outputs) f32."""
    batch, n_inputs = x.shape
    din_p, dh_p = w_in.shape
    dout_p = w_out.shape[1]
    n_stack = w_hid.shape[0]

    # Batch padding / tiling: 16-row alignment (bf16 packs 16 rows per vreg);
    # at least 2 tiles once batch > 16 (so the "parallel" axis spans both v7x
    # TensorCores); up to 256 rows per tile to amortize per-grid-step overhead
    # and fill the 256-wide MXU M dimension on v6e/v7x.
    b_pad0 = _round_up(batch, 16)
    if b_pad0 <= 16:
        b_tile = b_pad0
    else:
        b_tile = min(256, _round_up((b_pad0 + 1) // 2, 16))
    b_pad = _round_up(b_pad0, b_tile)

    x_pad = jnp.zeros((b_pad, din_p), jnp.bfloat16)
    x_pad = x_pad.at[:batch, :n_inputs].set(x.astype(jnp.bfloat16))

    gelu_dtype = _gelu_compute_dtype()
    kernel = functools.partial(fused_mlp_kernel, n_hid=n_hid, gelu_dtype=gelu_dtype)

    # VMEM budget: blocked weights/biases with constant index_map are DMA'd
    # once but double-buffered (2x), plus 2x input and 2x output tiles.  Only
    # override the compiler's default scoped limit when actually needed.
    weight_bytes = 2 * (w_in.size + w_hid.size + w_out.size) * 2   # bf16
    bias_bytes = 2 * (b_in.size + b_hid.size + b_out.size) * 4     # f32
    act_bytes = 2 * b_tile * din_p * 2 + 2 * b_tile * dout_p * 4
    needed = weight_bytes + bias_bytes + act_bytes
    cp_kwargs = dict(dimension_semantics=("parallel",))
    if needed > 12 * 1024 * 1024:
        cp_kwargs["vmem_limit_bytes"] = min(int(needed * 1.25), 100 * 1024 * 1024)

    out_pad = pl.pallas_call(
        kernel,
        out_shape=jax.ShapeDtypeStruct((b_pad, dout_p), jnp.float32),
        grid_spec=pltpu.PrefetchScalarGridSpec(
            num_scalar_prefetch=0,
            grid=(b_pad // b_tile,),
            in_specs=[
                # activations: one batch tile per grid step
                pl.BlockSpec((b_tile, din_p), lambda i: (i, 0)),
                # weights / biases: constant index_map -> fetched once, kept
                # VMEM-resident across all batch tiles.
                pl.BlockSpec((din_p, dh_p), lambda i: (0, 0)),
                pl.BlockSpec((1, dh_p), lambda i: (0, 0)),
                pl.BlockSpec((n_stack, dh_p, dh_p), lambda i: (0, 0, 0)),
                pl.BlockSpec((n_stack, 1, dh_p), lambda i: (0, 0, 0)),
                pl.BlockSpec((dh_p, dout_p), lambda i: (0, 0)),
                pl.BlockSpec((1, dout_p), lambda i: (0, 0)),
            ],
            out_specs=pl.BlockSpec((b_tile, dout_p), lambda i: (i, 0)),
        ),
        compiler_params=pltpu.CompilerParams(**cp_kwargs),
    )(x_pad, w_in, b_in, w_hid, b_hid, w_out, b_out)

    return out_pad[:batch, :n_outputs]


def init_deep_neural_params(key, n_inputs, n_hidden, n_layers, n_outputs):
    """Mirror the PyTorch module's parameter list.

    Layers (as in DeepNeural.__init__): Linear(n_inputs, n_hidden),
    (n_layers - 1) x Linear(n_hidden, n_hidden), Linear(n_hidden, n_outputs).
    _initialize_weights only matches the 'bias' branch for Linear params ->
    biases are 0; weights keep nn.Linear's default fan-in uniform init
    (deterministic JAX equivalent).  Weights are stored pre-transposed (in, out).
    """
    dims = [n_inputs] + [n_hidden] * n_layers + [n_outputs]
    params = []
    for i in range(len(dims) - 1):
        fan_in, fan_out = dims[i], dims[i + 1]
        key, sub = jax.random.split(key)
        bound = 1.0 / math.sqrt(fan_in)
        w = jax.random.uniform(sub, (fan_in, fan_out), jnp.float32,
                               minval=-bound, maxval=bound)
        b = jnp.zeros((fan_out,), jnp.float32)
        params.append((w, b))
    return params


def _reference_forward(x, params):
    """Pure-JAX f32 reference of DeepNeural.forward (correctness check)."""
    for w, b in params:
        y = x @ w + b
        x = 0.5 * y * (1.0 + jnp.tanh(_SQRT_2_OVER_PI * (y + 0.044715 * y ** 3)))
    return x


if __name__ == "__main__":
    # Small shapes consistent with the module's MLP structure.
    batch, n_inputs, n_hidden, n_layers, n_outputs = 8, 16, 32, 3, 8

    key = jax.random.PRNGKey(0)
    key, xkey = jax.random.split(key)
    x = jax.random.normal(xkey, (batch, n_inputs), jnp.float32)

    params = init_deep_neural_params(key, n_inputs, n_hidden, n_layers, n_outputs)

    # Pad / stack / cast parameters ONCE (hoisted out of the per-call path).
    packed, meta = prepare_packed_params(params)

    out = deep_neural_forward(x, *packed,
                              n_hid=meta["n_hid"], n_outputs=meta["n_outputs"])
    out = jax.block_until_ready(out)
    assert out.shape == (batch, n_outputs)

    ref = jax.block_until_ready(_reference_forward(x, params))
    # bf16 MXU inputs are a deliberate speed/precision trade-off; tolerance is
    # sized for ~0.4% relative bf16 error compounded over the 5 fused layers.
    assert jnp.allclose(out, ref, atol=2e-2, rtol=2e-2), "mismatch vs reference"

    print("KERNEL_OK")
</pallas_src>

<mosaic_0001>
module attributes {stable_mosaic.version = 11 : i64} {
  func.func @fused_mlp_kernel(%arg0: i32, %arg1: memref<16x128xbf16, #tpu.memory_space<vmem>>, %arg2: memref<128x128xbf16, #tpu.memory_space<vmem>>, %arg3: memref<1x128xf32, #tpu.memory_space<vmem>>, %arg4: memref<2x128x128xbf16, #tpu.memory_space<vmem>>, %arg5: memref<2x1x128xf32, #tpu.memory_space<vmem>>, %arg6: memref<128x128xbf16, #tpu.memory_space<vmem>>, %arg7: memref<1x128xf32, #tpu.memory_space<vmem>>, %arg8: memref<16x128xf32, #tpu.memory_space<vmem>>) attributes {dimension_semantics = [#tpu.dimension_semantics<parallel>], iteration_bounds = array<i64: 1>, scalar_prefetch = 0 : i64, scratch_operands = 0 : i64, tpu.core_type = #tpu.core_type<tc>, window_params = [{transform_indices = @transform_0, window_bounds = array<i64: 16, 128>}, {pipeline_mode = #tpu.pipeline_mode<synchronous>, transform_indices = @transform_1, window_bounds = array<i64: 128, 128>}, {pipeline_mode = #tpu.pipeline_mode<synchronous>, transform_indices = @transform_2, window_bounds = array<i64: 1, 128>}, {pipeline_mode = #tpu.pipeline_mode<synchronous>, transform_indices = @transform_3, window_bounds = array<i64: 2, 128, 128>}, {pipeline_mode = #tpu.pipeline_mode<synchronous>, transform_indices = @transform_4, window_bounds = array<i64: 2, 1, 128>}, {pipeline_mode = #tpu.pipeline_mode<synchronous>, transform_indices = @transform_5, window_bounds = array<i64: 128, 128>}, {pipeline_mode = #tpu.pipeline_mode<synchronous>, transform_indices = @transform_6, window_bounds = array<i64: 1, 128>}, {transform_indices = @transform_7, window_bounds = array<i64: 16, 128>}]} {
    %c0 = arith.constant 0 : index
    %c0_0 = arith.constant 0 : index
    %0 = vector.load %arg1[%c0, %c0_0] : memref<16x128xbf16, #tpu.memory_space<vmem>>, vector<16x128xbf16>
    %c0_1 = arith.constant 0 : index
    %c0_2 = arith.constant 0 : index
    %1 = vector.load %arg2[%c0_1, %c0_2] : memref<128x128xbf16, #tpu.memory_space<vmem>>, vector<128x128xbf16>
    %c0_3 = arith.constant 0 : index
    %c0_4 = arith.constant 0 : index
    %2 = vector.load %arg3[%c0_3, %c0_4] : memref<1x128xf32, #tpu.memory_space<vmem>>, vector<1x128xf32>
    %cst = arith.constant dense<0.000000e+00> : vector<16x128xf32>
    %3 = tpu.matmul %0, %1, %cst {dimension_numbers = #tpu.dot_dimension_numbers<[1], [0], [0], [1], [0, 0, 1, 1], [], []>} : vector<16x128xbf16>, vector<128x128xbf16>, vector<16x128xf32> -> vector<16x128xf32>
    %4 = vector.broadcast %2 : vector<1x128xf32> to vector<16x128xf32>
    %5 = arith.addf %3, %4 : vector<16x128xf32>
    %6 = arith.mulf %5, %5 : vector<16x128xf32>
    %cst_5 = arith.constant 0.0356774069 : f32
    %7 = vector.broadcast %cst_5 : f32 to vector<16x128xf32>
    %8 = arith.mulf %7, %6 : vector<16x128xf32>
    %cst_6 = arith.constant 0.797884583 : f32
    %9 = vector.broadcast %cst_6 : f32 to vector<16x128xf32>
    %10 = arith.addf %9, %8 : vector<16x128xf32>
    %11 = arith.mulf %5, %10 : vector<16x128xf32>
    %12 = math.tanh %11 : vector<16x128xf32>
    %cst_7 = arith.constant 5.000000e-01 : f32
    %13 = vector.broadcast %cst_7 : f32 to vector<16x128xf32>
    %14 = arith.mulf %13, %12 : vector<16x128xf32>
    %cst_8 = arith.constant 5.000000e-01 : f32
    %15 = vector.broadcast %cst_8 : f32 to vector<16x128xf32>
    %16 = arith.addf %15, %14 : vector<16x128xf32>
    %17 = arith.mulf %5, %16 : vector<16x128xf32>
    %c0_9 = arith.constant 0 : index
    %c0_10 = arith.constant 0 : index
    %c0_11 = arith.constant 0 : index
    %18 = vector.load %arg4[%c0_9, %c0_10, %c0_11] : memref<2x128x128xbf16, #tpu.memory_space<vmem>>, vector<1x128x128xbf16>
    %19 = vector.shape_cast %18 : vector<1x128x128xbf16> to vector<128x128xbf16>
    %c0_12 = arith.constant 0 : index
    %c0_13 = arith.constant 0 : index
    %c0_14 = arith.constant 0 : index
    %20 = vector.load %arg5[%c0_12, %c0_13, %c0_14] : memref<2x1x128xf32, #tpu.memory_space<vmem>>, vector<1x1x128xf32>
    %21 = vector.shape_cast %20 : vector<1x1x128xf32> to vector<1x128xf32>
    %22 = arith.truncf %17 : vector<16x128xf32> to vector<16x128xbf16>
    %cst_15 = arith.constant dense<0.000000e+00> : vector<16x128xf32>
    %23 = tpu.matmul %22, %19, %cst_15 {dimension_numbers = #tpu.dot_dimension_numbers<[1], [0], [0], [1], [0, 0, 1, 1], [], []>} : vector<16x128xbf16>, vector<128x128xbf16>, vector<16x128xf32> -> vector<16x128xf32>
    %24 = vector.broadcast %21 : vector<1x128xf32> to vector<16x128xf32>
    %25 = arith.addf %23, %24 : vector<16x128xf32>
    %26 = arith.mulf %25, %25 : vector<16x128xf32>
    %cst_16 = arith.constant 0.0356774069 : f32
    %27 = vector.broadcast %cst_16 : f32 to vector<16x128xf32>
    %28 = arith.mulf %27, %26 : vector<16x128xf32>
    %cst_17 = arith.constant 0.797884583 : f32
    %29 = vector.broadcast %cst_17 : f32 to vector<16x128xf32>
    %30 = arith.addf %29, %28 : vector<16x128xf32>
    %31 = arith.mulf %25, %30 : vector<16x128xf32>
    %32 = math.tanh %31 : vector<16x128xf32>
    %cst_18 = arith.constant 5.000000e-01 : f32
    %33 = vector.broadcast %cst_18 : f32 to vector<16x128xf32>
    %34 = arith.mulf %33, %32 : vector<16x128xf32>
    %cst_19 = arith.constant 5.000000e-01 : f32
    %35 = vector.broadcast %cst_19 : f32 to vector<16x128xf32>
    %36 = arith.addf %35, %34 : vector<16x128xf32>
    %37 = arith.mulf %25, %36 : vector<16x128xf32>
    %c1 = arith.constant 1 : index
    %c0_20 = arith.constant 0 : index
    %c0_21 = arith.constant 0 : index
    %38 = vector.load %arg4[%c1, %c0_20, %c0_21] : memref<2x128x128xbf16, #tpu.memory_space<vmem>>, vector<1x128x128xbf16>
    %39 = vector.shape_cast %38 : vector<1x128x128xbf16> to vector<128x128xbf16>
    %c1_22 = arith.constant 1 : index
    %c0_23 = arith.constant 0 : index
    %c0_24 = arith.constant 0 : index
    %40 = vector.load %arg5[%c1_22, %c0_23, %c0_24] : memref<2x1x128xf32, #tpu.memory_space<vmem>>, vector<1x1x128xf32>
    %41 = vector.shape_cast %40 : vector<1x1x128xf32> to vector<1x128xf32>
    %42 = arith.truncf %37 : vector<16x128xf32> to vector<16x128xbf16>
    %cst_25 = arith.constant dense<0.000000e+00> : vector<16x128xf32>
    %43 = tpu.matmul %42, %39, %cst_25 {dimension_numbers = #tpu.dot_dimension_numbers<[1], [0], [0], [1], [0, 0, 1, 1], [], []>} : vector<16x128xbf16>, vector<128x128xbf16>, vector<16x128xf32> -> vector<16x128xf32>
    %44 = vector.broadcast %41 : vector<1x128xf32> to vector<16x128xf32>
    %45 = arith.addf %43, %44 : vector<16x128xf32>
    %46 = arith.mulf %45, %45 : vector<16x128xf32>
    %cst_26 = arith.constant 0.0356774069 : f32
    %47 = vector.broadcast %cst_26 : f32 to vector<16x128xf32>
    %48 = arith.mulf %47, %46 : vector<16x128xf32>
    %cst_27 = arith.constant 0.797884583 : f32
    %49 = vector.broadcast %cst_27 : f32 to vector<16x128xf32>
    %50 = arith.addf %49, %48 : vector<16x128xf32>
    %51 = arith.mulf %45, %50 : vector<16x128xf32>
    %52 = math.tanh %51 : vector<16x128xf32>
    %cst_28 = arith.constant 5.000000e-01 : f32
    %53 = vector.broadcast %cst_28 : f32 to vector<16x128xf32>
    %54 = arith.mulf %53, %52 : vector<16x128xf32>
    %cst_29 = arith.constant 5.000000e-01 : f32
    %55 = vector.broadcast %cst_29 : f32 to vector<16x128xf32>
    %56 = arith.addf %55, %54 : vector<16x128xf32>
    %57 = arith.mulf %45, %56 : vector<16x128xf32>
    %c0_30 = arith.constant 0 : index
    %c0_31 = arith.constant 0 : index
    %58 = vector.load %arg6[%c0_30, %c0_31] : memref<128x128xbf16, #tpu.memory_space<vmem>>, vector<128x128xbf16>
    %c0_32 = arith.constant 0 : index
    %c0_33 = arith.constant 0 : index
    %59 = vector.load %arg7[%c0_32, %c0_33] : memref<1x128xf32, #tpu.memory_space<vmem>>, vector<1x128xf32>
    %60 = arith.truncf %57 : vector<16x128xf32> to vector<16x128xbf16>
    %cst_34 = arith.constant dense<0.000000e+00> : vector<16x128xf32>
    %61 = tpu.matmul %60, %58, %cst_34 {dimension_numbers = #tpu.dot_dimension_numbers<[1], [0], [0], [1], [0, 0, 1, 1], [], []>} : vector<16x128xbf16>, vector<128x128xbf16>, vector<16x128xf32> -> vector<16x128xf32>
    %62 = vector.broadcast %59 : vector<1x128xf32> to vector<16x128xf32>
    %63 = arith.addf %61, %62 : vector<16x128xf32>
    %64 = arith.mulf %63, %63 : vector<16x128xf32>
    %cst_35 = arith.constant 0.0356774069 : f32
    %65 = vector.broadcast %cst_35 : f32 to vector<16x128xf32>
    %66 = arith.mulf %65, %64 : vector<16x128xf32>
    %cst_36 = arith.constant 0.797884583 : f32
    %67 = vector.broadcast %cst_36 : f32 to vector<16x128xf32>
    %68 = arith.addf %67, %66 : vector<16x128xf32>
    %69 = arith.mulf %63, %68 : vector<16x128xf32>
    %70 = math.tanh %69 : vector<16x128xf32>
    %cst_37 = arith.constant 5.000000e-01 : f32
    %71 = vector.broadcast %cst_37 : f32 to vector<16x128xf32>
    %72 = arith.mulf %71, %70 : vector<16x128xf32>
    %cst_38 = arith.constant 5.000000e-01 : f32
    %73 = vector.broadcast %cst_38 : f32 to vector<16x128xf32>
    %74 = arith.addf %73, %72 : vector<16x128xf32>
    %75 = arith.mulf %63, %74 : vector<16x128xf32>
    %c0_39 = arith.constant 0 : index
    %c0_40 = arith.constant 0 : index
    %76 = vector.load %arg8[%c0_39, %c0_40] : memref<16x128xf32, #tpu.memory_space<vmem>>, vector<16x128xf32>
    tpu.vector_store %arg8[%c0_39, %c0_40], %75 {strides = array<i32>} : memref<16x128xf32, #tpu.memory_space<vmem>>, vector<16x128xf32>,
    return
  }
  func.func @transform_0(%arg0: i32) -> (i32, i32) {
    %c0_i32 = arith.constant 0 : i32
    %c0_i32_0 = arith.constant 0 : i32
    return %arg0, %c0_i32 : i32, i32
  }
  func.func @transform_1(%arg0: i32) -> (i32, i32) {
    %c0_i32 = arith.constant 0 : i32
    %c0_i32_0 = arith.constant 0 : i32
    %c0_i32_1 = arith.constant 0 : i32
    return %c0_i32, %c0_i32_0 : i32, i32
  }
  func.func @transform_2(%arg0: i32) -> (i32, i32) {
    %c0_i32 = arith.constant 0 : i32
    %c0_i32_0 = arith.constant 0 : i32
    %c0_i32_1 = arith.constant 0 : i32
    return %c0_i32, %c0_i32_0 : i32, i32
  }
  func.func @transform_3(%arg0: i32) -> (i32, i32, i32) {
    %c0_i32 = arith.constant 0 : i32
    %c0_i32_0 = arith.constant 0 : i32
    %c0_i32_1 = arith.constant 0 : i32
    %c0_i32_2 = arith.constant 0 : i32
    return %c0_i32, %c0_i32_0, %c0_i32_1 : i32, i32, i32
  }
  func.func @transform_4(%arg0: i32) -> (i32, i32, i32) {
    %c0_i32 = arith.constant 0 : i32
    %c0_i32_0 = arith.constant 0 : i32
    %c0_i32_1 = arith.constant 0 : i32
    %c0_i32_2 = arith.constant 0 : i32
    return %c0_i32, %c0_i32_0, %c0_i32_1 : i32, i32, i32
  }
  func.func @transform_5(%arg0: i32) -> (i32, i32) {
    %c0_i32 = arith.constant 0 : i32
    %c0_i32_0 = arith.constant 0 : i32
    %c0_i32_1 = arith.constant 0 : i32
    return %c0_i32, %c0_i32_0 : i32, i32
  }
  func.func @transform_6(%arg0: i32) -> (i32, i32) {
    %c0_i32 = arith.constant 0 : i32
    %c0_i32_0 = arith.constant 0 : i32
    %c0_i32_1 = arith.constant 0 : i32
    return %c0_i32, %c0_i32_0 : i32, i32
  }
  func.func @transform_7(%arg0: i32) -> (i32, i32) {
    %c0_i32 = arith.constant 0 : i32
    %c0_i32_0 = arith.constant 0 : i32
    return %arg0, %c0_i32 : i32, i32
  }
}

</mosaic_0001>

<llo_original>
// kernel: deep_neural_forward.1
$region0: #{deep_neural_forward.1}
  #allocation0 [shape = 'u32[]', space=smem, size = 0x4, offset = 0x4, fixed_abs, tag = 'smem constant byte address 0x4 - core index']
  #allocation1 [shape = 'u32[72,128]{1,0:T(1,128)}', space=vmem, size = 0x9000, scoped, tag = 'internal scratch']
  %s0 = inlined_call_operand.vmem [shape: bf16[16,128], index: 0, kind: input, shape index: {}]
  %s1 = inlined_call_operand.hbm [shape: bf16[128,128], index: 1, kind: input, shape index: {}]
  %s2 = inlined_call_operand.vmem [shape: f32[1,128], index: 2, kind: input, shape index: {}]
  %s3 = inlined_call_operand.hbm [shape: bf16[2,128,128], index: 3, kind: input, shape index: {}]
  %s4 = inlined_call_operand.vmem [shape: f32[2,1,128], index: 4, kind: input, shape index: {}]
  %s5 = inlined_call_operand.hbm [shape: bf16[128,128], index: 5, kind: input, shape index: {}]
  %s6 = inlined_call_operand.vmem [shape: f32[1,128], index: 6, kind: input, shape index: {}]
  %s7 = inlined_call_operand.vmem [shape: f32[16,128], index: 7, kind: output, shape index: {}]
  %s8 = sld [smem:[#allocation0]]
  $region50: #{deep_neural_forward.1} parent=0
    _
  %s10 = ssub.s32 1, %s8
  %s11 = scalar_select 0, %s10, %s8
  $region1: #{deep_neural_forward.1} parent=0
    #allocation2 [shape = 'u8[32768]{0}', space=vmem, size = 0x8000, scoped, tag = 'input window, operand 1, single buffered']
    #allocation3 [shape = 's32[1]{0}', space=sflag, size = 0x4, scoped, tag = 'scoped memory for deep_neural_forward.1']
    #allocation4 [shape = 'u8[65536]{0}', space=vmem, size = 0x10000, scoped, tag = 'input window, operand 3, single buffered']
    #allocation5 [shape = 's32[1]{0}', space=sflag, size = 0x4, scoped, tag = 'scoped memory for deep_neural_forward.1']
    #allocation6 [shape = 'u8[32768]{0}', space=vmem, size = 0x8000, scoped, tag = 'input window, operand 5, single buffered']
    %12 = vsyncpa [#allocation3], 0
    %13 = vsyncpa [#allocation5], 0
    // Predicated region
    $region2: #{deep_neural_forward.1} parent=1 // pred_check
      _
    $region3: #{deep_neural_forward.1} parent=1 // pred_check_branch
      %15 = sbr.rel (0) target = $region5
    $region4: #{deep_neural_forward.1} parent=1 // pred_region
      _
    $region5: #{deep_neural_forward.1} parent=1 // pred_fallthru
      _
    // Predicated region
    $region6: #{deep_neural_forward.1} parent=1 // pred_check
      _
    $region7: #{deep_neural_forward.1} parent=1 // pred_check_branch
      %17 = sbr.rel (0) target = $region9
    $region8: #{deep_neural_forward.1} parent=1 // pred_region
      %19 = vsyncadd [#allocation3], 0
      %s20 = sshll.u32 %s1, 4
      %s21 = int_to_ptr.hbm [resolvable:$true] %s20
      %s22 = sshll.u32 [#allocation2], 4
      %s23 = int_to_ptr.vmem [resolvable:$true] %s22
      %28 = dma.hbm_to_vmem [thread:$0]  %s21, 1024, %s23, [#allocation3], 64, 64, 4
    $region9: #{deep_neural_forward.1} parent=1 // pred_fallthru
      _
    // Predicated region
    $region10: #{deep_neural_forward.1} parent=1 // pred_check
      _
    $region11: #{deep_neural_forward.1} parent=1 // pred_check_branch
      %30 = sbr.rel (0) target = $region13
    $region12: #{deep_neural_forward.1} parent=1 // pred_region
      _
    $region13: #{deep_neural_forward.1} parent=1 // pred_fallthru
      _
    // Predicated region
    $region14: #{deep_neural_forward.1} parent=1 // pred_check
      _
    $region15: #{deep_neural_forward.1} parent=1 // pred_check_branch
      %32 = sbr.rel (0) target = $region17
    $region16: #{deep_neural_forward.1} parent=1 // pred_region
      %34 = vsyncadd [#allocation5], 0
      %s35 = sshll.u32 %s3, 4
      %s36 = int_to_ptr.hbm [resolvable:$true] %s35
      %s37 = sshll.u32 [#allocation4], 4
      %s38 = int_to_ptr.vmem [resolvable:$true] %s37
      %43 = dma.hbm_to_vmem [thread:$0]  %s36, 2048, %s38, [#allocation5], 64, 64, 4
    $region17: #{deep_neural_forward.1} parent=1 // pred_fallthru
      _
    // Predicated region
    $region18: #{deep_neural_forward.1} parent=1 // pred_check
      _
    $region19: #{deep_neural_forward.1} parent=1 // pred_check_branch
      %45 = sbr.rel (0) target = $region21
    $region20: #{deep_neural_forward.1} parent=1 // pred_region
      _
    $region21: #{deep_neural_forward.1} parent=1 // pred_fallthru
      _
    // Predicated region
    $region22: #{deep_neural_forward.1} parent=1 // pred_check
      _
    $region23: #{deep_neural_forward.1} parent=1 // pred_check_branch
      %47 = sbr.rel (0) target = $region25
    $region24: #{deep_neural_forward.1} parent=1 // pred_region
      %49 = vsyncadd [#allocation5], 0
      %s50 = sshll.u32 %s5, 4
      %s51 = int_to_ptr.hbm [resolvable:$true] %s50
      %s52 = sshll.u32 [#allocation6], 4
      %s53 = int_to_ptr.vmem [resolvable:$true] %s52
      %58 = dma.hbm_to_vmem [thread:$0]  %s51, 1024, %s53, [#allocation5], 64, 64, 4
    $region25: #{deep_neural_forward.1} parent=1 // pred_fallthru
      _
    // Predicated region
    $region26: #{deep_neural_forward.1} parent=1 // pred_check
      _
    $region27: #{deep_neural_forward.1} parent=1 // pred_check_branch
      %60 = sbr.rel (0) target = $region29
    $region28: #{deep_neural_forward.1} parent=1 // pred_region
      _
    $region29: #{deep_neural_forward.1} parent=1 // pred_fallthru
      _
    // Predicated region
    $region30: #{deep_neural_forward.1} parent=1 // pred_check
      _
    $region31: #{deep_neural_forward.1} parent=1 // pred_check_branch
      %62 = sbr.rel (0) target = $region33
    $region32: #{deep_neural_forward.1} parent=1 // pred_region
      %64 = dma.done [#allocation3], 1024
    $region33: #{deep_neural_forward.1} parent=1 // pred_fallthru
      _
    // Predicated region
    $region34: #{deep_neural_forward.1} parent=1 // pred_check
      _
    $region35: #{deep_neural_forward.1} parent=1 // pred_check_branch
      %66 = sbr.rel (0) target = $region37
    $region36: #{deep_neural_forward.1} parent=1 // pred_region
      %68 = dma.done [#allocation5], 2048
    $region37: #{deep_neural_forward.1} parent=1 // pred_fallthru
      _
    // Predicated region
    $region38: #{deep_neural_forward.1} parent=1 // pred_check
      _
    $region39: #{deep_neural_forward.1} parent=1 // pred_check_branch
      %70 = sbr.rel (0) target = $region41
    $region40: #{deep_neural_forward.1} parent=1 // pred_region
      %72 = dma.done [#allocation5], 1024
    $region41: #{deep_neural_forward.1} parent=1 // pred_fallthru
      _
    %v73 = vld [vmem:[%s0] sm:$0xf]
    %v74 = vld [vmem:[%s0 + $0x4] sm:$0xf]
    %v75 = vld [vmem:[#allocation2] sm:$0xf]
    %v76 = vld [vmem:[#allocation2 + $0x4] sm:$0xf]
    %v77 = vld [vmem:[#allocation2 + $0x8] sm:$0xf]
    %v78 = vld [vmem:[#allocation2 + $0xc] sm:$0xf]
    %v79 = vld [vmem:[#allocation2 + $0x10] sm:$0xf]
    %v80 = vld [vmem:[#allocation2 + $0x14] sm:$0xf]
    %v81 = vld [vmem:[#allocation2 + $0x18] sm:$0xf]
    %v82 = vld [vmem:[#allocation2 + $0x1c] sm:$0xf]
    %v83 = vld [vmem:[#allocation2 + $0x20] sm:$0xf]
    %v84 = vld [vmem:[#allocation2 + $0x24] sm:$0xf]
    %v85 = vld [vmem:[#allocation2 + $0x28] sm:$0xf]
    %v86 = vld [vmem:[#allocation2 + $0x2c] sm:$0xf]
    %v87 = vld [vmem:[#allocation2 + $0x30] sm:$0xf]
    %v88 = vld [vmem:[#allocation2 + $0x34] sm:$0xf]
    %v89 = vld [vmem:[#allocation2 + $0x38] sm:$0xf]
    %v90 = vld [vmem:[#allocation2 + $0x3c] sm:$0xf]
    %v91 = vld [vmem:[%s2] sm:$0x1]
    %v93 = vperm.slane %v91, 0
    %v97 = vunpack.c.l.b16 %v73
    %v98 = vunpack.c.l.b16 %v74
    %v99 = vpack.c.b16 %v98, %v97
    %v117 = vunpack.c.l.b16 %v75
    %v118 = vunpack.c.l.b16 %v76
    %v119 = vunpack.c.l.b16 %v77
    %v120 = vunpack.c.l.b16 %v78
    %v121 = vunpack.c.l.b16 %v79
    %v122 = vunpack.c.l.b16 %v80
    %v123 = vunpack.c.l.b16 %v81
    %v124 = vunpack.c.l.b16 %v82
    %v125 = vunpack.c.l.b16 %v83
    %v126 = vunpack.c.l.b16 %v84
    %v127 = vunpack.c.l.b16 %v85
    %v128 = vunpack.c.l.b16 %v86
    %v129 = vunpack.c.l.b16 %v87
    %v130 = vunpack.c.l.b16 %v88
    %v131 = vunpack.c.l.b16 %v89
    %v132 = vunpack.c.l.b16 %v90
    %v133 = vpack.c.b16 %v118, %v117
    %v134 = vpack.c.b16 %v120, %v119
    %v135 = vpack.c.b16 %v122, %v121
    %v136 = vpack.c.b16 %v124, %v123
    %v137 = vpack.c.b16 %v126, %v125
    %v138 = vpack.c.b16 %v128, %v127
    %v139 = vpack.c.b16 %v130, %v129
    %v140 = vpack.c.b16 %v132, %v131
    %149 = vmatpush.bf16.msra.mxu0 %v140
    %150 = vmatpush.bf16.msra.mxu0 %v139
    %151 = vmatpush.bf16.msra.mxu0 %v138
    %152 = vmatpush.bf16.msra.mxu0 %v137
    %153 = vmatpush.bf16.msra.mxu0 %v136
    %154 = vmatpush.bf16.msra.mxu0 %v135
    %155 = vmatpush.bf16.msra.mxu0 %v134
    %156 = vmatpush.bf16.msra.mxu0 %v133
    %157 = vmatmul.bf16.gmra.mxu0 %v99
    %v158 = vpop.f32.mrf.mxu0
    %v159 = vadd.f32 %v93, %v158
    %v160 = vpop.f32.mrf.mxu0
    %v161 = vadd.f32 %v93, %v160
    %162 = vdwg.mxu0
    %v163 = vmul.f32 %v159, %v159
    %v164 = vmul.f32 %v161, %v161
    %v165 = vmul.f32 %v163, 0.035677407
    %v166 = vmul.f32 %v164, 0.035677407
    %v167 = vadd.f32 %v165, 0.7978846
    %v168 = vadd.f32 %v166, 0.7978846
    %v169 = vmul.f32 %v159, %v167
    %v170 = vmul.f32 %v161, %v168
    %v171 = vtanh.pop %v169
    %v172 = vtanh.pop %v170
    %v173 = vmul.f32 %v171, 0.5
    %v174 = vmul.f32 %v172, 0.5
    %v175 = vadd.f32 %v173, 0.5
    %v176 = vadd.f32 %v174, 0.5
    %v177 = vmul.f32 %v159, %v175
    %v178 = vmul.f32 %v161, %v176
    %v179 = vld [vmem:[#allocation4] sm:$0xf]
    %v180 = vld [vmem:[#allocation4 + $0x4] sm:$0xf]
    %v181 = vld [vmem:[#allocation4 + $0x8] sm:$0xf]
    %v182 = vld [vmem:[#allocation4 + $0xc] sm:$0xf]
    %v183 = vld [vmem:[#allocation4 + $0x10] sm:$0xf]
    %v184 = vld [vmem:[#allocation4 + $0x14] sm:$0xf]
    %v185 = vld [vmem:[#allocation4 + $0x18] sm:$0xf]
    %v186 = vld [vmem:[#allocation4 + $0x1c] sm:$0xf]
    %v187 = vld [vmem:[#allocation4 + $0x20] sm:$0xf]
    %v188 = vld [vmem:[#allocation4 + $0x24] sm:$0xf]
    %v189 = vld [vmem:[#allocation4 + $0x28] sm:$0xf]
    %v190 = vld [vmem:[#allocation4 + $0x2c] sm:$0xf]
    %v191 = vld [vmem:[#allocation4 + $0x30] sm:$0xf]
    %v192 = vld [vmem:[#allocation4 + $0x34] sm:$0xf]
    %v193 = vld [vmem:[#allocation4 + $0x38] sm:$0xf]
    %v194 = vld [vmem:[#allocation4 + $0x3c] sm:$0xf]
    %v195 = vld [vmem:[%s4] sm:$0x1]
    %v196 = vpack.c.bf16 %v178, %v177
    %v198 = vperm.slane %v195, 0
    %v216 = vunpack.c.l.b16 %v179
    %v217 = vunpack.c.l.b16 %v180
    %v218 = vunpack.c.l.b16 %v181
    %v219 = vunpack.c.l.b16 %v182
    %v220 = vunpack.c.l.b16 %v183
    %v221 = vunpack.c.l.b16 %v184
    %v222 = vunpack.c.l.b16 %v185
    %v223 = vunpack.c.l.b16 %v186
    %v224 = vunpack.c.l.b16 %v187
    %v225 = vunpack.c.l.b16 %v188
    %v226 = vunpack.c.l.b16 %v189
    %v227 = vunpack.c.l.b16 %v190
    %v228 = vunpack.c.l.b16 %v191
    %v229 = vunpack.c.l.b16 %v192
    %v230 = vunpack.c.l.b16 %v193
    %v231 = vunpack.c.l.b16 %v194
    %v232 = vpack.c.b16 %v217, %v216
    %v233 = vpack.c.b16 %v219, %v218
    %v234 = vpack.c.b16 %v221, %v220
    %v235 = vpack.c.b16 %v223, %v222
    %v236 = vpack.c.b16 %v225, %v224
    %v237 = vpack.c.b16 %v227, %v226
    %v238 = vpack.c.b16 %v229, %v228
    %v239 = vpack.c.b16 %v231, %v230
    %248 = vmatpush.bf16.msra.mxu0 %v239
    %249 = vmatpush.bf16.msra.mxu0 %v238
    %250 = vmatpush.bf16.msra.mxu0 %v237
    %251 = vmatpush.bf16.msra.mxu0 %v236
    %252 = vmatpush.bf16.msra.mxu0 %v235
    %253 = vmatpush.bf16.msra.mxu0 %v234
    %254 = vmatpush.bf16.msra.mxu0 %v233
    %255 = vmatpush.bf16.msra.mxu0 %v232
    %256 = vmatmul.bf16.gmra.mxu0 %v196
    %v257 = vpop.f32.mrf.mxu0
    %v258 = vadd.f32 %v198, %v257
    %v259 = vpop.f32.mrf.mxu0
    %v260 = vadd.f32 %v198, %v259
    %261 = vdwg.mxu0
    %v262 = vmul.f32 %v258, %v258
    %v263 = vmul.f32 %v260, %v260
    %v264 = vmul.f32 %v262, 0.035677407
    %v265 = vmul.f32 %v263, 0.035677407
    %v266 = vadd.f32 %v264, 0.7978846
    %v267 = vadd.f32 %v265, 0.7978846
    %v268 = vmul.f32 %v258, %v266
    %v269 = vmul.f32 %v260, %v267
    %v270 = vtanh.pop %v268
    %v271 = vtanh.pop %v269
    %v272 = vmul.f32 %v270, 0.5
    %v273 = vmul.f32 %v271, 0.5
    %v274 = vadd.f32 %v272, 0.5
    %v275 = vadd.f32 %v273, 0.5
    %v276 = vmul.f32 %v258, %v274
    %v277 = vmul.f32 %v260, %v275
    %s278 = scalar_lea.vmem [#allocation4], 64
    %v279 = vld [vmem:[%s278] sm:$0xf]
    %v280 = vld [vmem:[%s278 + $0x4] sm:$0xf]
    %v281 = vld [vmem:[%s278 + $0x8] sm:$0xf]
    %v282 = vld [vmem:[%s278 + $0xc] sm:$0xf]
    %v283 = vld [vmem:[%s278 + $0x10] sm:$0xf]
    %v284 = vld [vmem:[%s278 + $0x14] sm:$0xf]
    %v285 = vld [vmem:[%s278 + $0x18] sm:$0xf]
    %v286 = vld [vmem:[%s278 + $0x1c] sm:$0xf]
    %v287 = vld [vmem:[%s278 + $0x20] sm:$0xf]
    %v288 = vld [vmem:[%s278 + $0x24] sm:$0xf]
    %v289 = vld [vmem:[%s278 + $0x28] sm:$0xf]
    %v290 = vld [vmem:[%s278 + $0x2c] sm:$0xf]
    %v291 = vld [vmem:[%s278 + $0x30] sm:$0xf]
    %v292 = vld [vmem:[%s278 + $0x34] sm:$0xf]
    %v293 = vld [vmem:[%s278 + $0x38] sm:$0xf]
    %v294 = vld [vmem:[%s278 + $0x3c] sm:$0xf]
    %s295 = scalar_lea.vmem %s4, 1
    %v296 = vld [vmem:[%s295] sm:$0x1]
    %v297 = vpack.c.bf16 %v277, %v276
    %v299 = vperm.slane %v296, 0
    %v317 = vunpack.c.l.b16 %v279
    %v318 = vunpack.c.l.b16 %v280
    %v319 = vunpack.c.l.b16 %v281
    %v320 = vunpack.c.l.b16 %v282
    %v321 = vunpack.c.l.b16 %v283
    %v322 = vunpack.c.l.b16 %v284
    %v323 = vunpack.c.l.b16 %v285
    %v324 = vunpack.c.l.b16 %v286
    %v325 = vunpack.c.l.b16 %v287
    %v326 = vunpack.c.l.b16 %v288
    %v327 = vunpack.c.l.b16 %v289
    %v328 = vunpack.c.l.b16 %v290
    %v329 = vunpack.c.l.b16 %v291
    %v330 = vunpack.c.l.b16 %v292
    %v331 = vunpack.c.l.b16 %v293
    %v332 = vunpack.c.l.b16 %v294
    %v333 = vpack.c.b16 %v318, %v317
    %v334 = vpack.c.b16 %v320, %v319
    %v335 = vpack.c.b16 %v322, %v321
    %v336 = vpack.c.b16 %v324, %v323
    %v337 = vpack.c.b16 %v326, %v325
    %v338 = vpack.c.b16 %v328, %v327
    %v339 = vpack.c.b16 %v330, %v329
    %v340 = vpack.c.b16 %v332, %v331
    %349 = vmatpush.bf16.msra.mxu0 %v340
    %350 = vmatpush.bf16.msra.mxu0 %v339
    %351 = vmatpush.bf16.msra.mxu0 %v338
    %352 = vmatpush.bf16.msra.mxu0 %v337
    %353 = vmatpush.bf16.msra.mxu0 %v336
    %354 = vmatpush.bf16.msra.mxu0 %v335
    %355 = vmatpush.bf16.msra.mxu0 %v334
    %356 = vmatpush.bf16.msra.mxu0 %v333
    %357 = vmatmul.bf16.gmra.mxu0 %v297
    %v358 = vpop.f32.mrf.mxu0
    %v359 = vadd.f32 %v299, %v358
    %v360 = vpop.f32.mrf.mxu0
    %v361 = vadd.f32 %v299, %v360
    %362 = vdwg.mxu0
    %v363 = vmul.f32 %v359, %v359
    %v364 = vmul.f32 %v361, %v361
    %v365 = vmul.f32 %v363, 0.035677407
    %v366 = vmul.f32 %v364, 0.035677407
    %v367 = vadd.f32 %v365, 0.7978846
    %v368 = vadd.f32 %v366, 0.7978846
    %v369 = vmul.f32 %v359, %v367
    %v370 = vmul.f32 %v361, %v368
    %v371 = vtanh.pop %v369
    %v372 = vtanh.pop %v370
    %v373 = vmul.f32 %v371, 0.5
    %v374 = vmul.f32 %v372, 0.5
    %v375 = vadd.f32 %v373, 0.5
    %v376 = vadd.f32 %v374, 0.5
    %v377 = vmul.f32 %v359, %v375
    %v378 = vmul.f32 %v361, %v376
    %v379 = vld [vmem:[#allocation6] sm:$0xf]
    %v380 = vld [vmem:[#allocation6 + $0x4] sm:$0xf]
    %v381 = vld [vmem:[#allocation6 + $0x8] sm:$0xf]
    %v382 = vld [vmem:[#allocation6 + $0xc] sm:$0xf]
    %v383 = vld [vmem:[#allocation6 + $0x10] sm:$0xf]
    %v384 = vld [vmem:[#allocation6 + $0x14] sm:$0xf]
    %v385 = vld [vmem:[#allocation6 + $0x18] sm:$0xf]
    %v386 = vld [vmem:[#allocation6 + $0x1c] sm:$0xf]
    %v387 = vld [vmem:[#allocation6 + $0x20] sm:$0xf]
    %v388 = vld [vmem:[#allocation6 + $0x24] sm:$0xf]
    %v389 = vld [vmem:[#allocation6 + $0x28] sm:$0xf]
    %v390 = vld [vmem:[#allocation6 + $0x2c] sm:$0xf]
    %v391 = vld [vmem:[#allocation6 + $0x30] sm:$0xf]
    %v392 = vld [vmem:[#allocation6 + $0x34] sm:$0xf]
    %v393 = vld [vmem:[#allocation6 + $0x38] sm:$0xf]
    %v394 = vld [vmem:[#allocation6 + $0x3c] sm:$0xf]
    %v395 = vld [vmem:[%s6] sm:$0x1]
    %v396 = vpack.c.bf16 %v378, %v377
    %v398 = vperm.slane %v395, 0
    %v416 = vunpack.c.l.b16 %v379
    %v417 = vunpack.c.l.b16 %v380
    %v418 = vunpack.c.l.b16 %v381
    %v419 = vunpack.c.l.b16 %v382
    %v420 = vunpack.c.l.b16 %v383
    %v421 = vunpack.c.l.b16 %v384
    %v422 = vunpack.c.l.b16 %v385
    %v423 = vunpack.c.l.b16 %v386
    %v424 = vunpack.c.l.b16 %v387
    %v425 = vunpack.c.l.b16 %v388
    %v426 = vunpack.c.l.b16 %v389
    %v427 = vunpack.c.l.b16 %v390
    %v428 = vunpack.c.l.b16 %v391
    %v429 = vunpack.c.l.b16 %v392
    %v430 = vunpack.c.l.b16 %v393
    %v431 = vunpack.c.l.b16 %v394
    %v432 = vpack.c.b16 %v417, %v416
    %v433 = vpack.c.b16 %v419, %v418
    %v434 = vpack.c.b16 %v421, %v420
    %v435 = vpack.c.b16 %v423, %v422
    %v436 = vpack.c.b16 %v425, %v424
    %v437 = vpack.c.b16 %v427, %v426
    %v438 = vpack.c.b16 %v429, %v428
    %v439 = vpack.c.b16 %v431, %v430
    %448 = vmatpush.bf16.msra.mxu0 %v439
    %449 = vmatpush.bf16.msra.mxu0 %v438
    %450 = vmatpush.bf16.msra.mxu0 %v437
    %451 = vmatpush.bf16.msra.mxu0 %v436
    %452 = vmatpush.bf16.msra.mxu0 %v435
    %453 = vmatpush.bf16.msra.mxu0 %v434
    %454 = vmatpush.bf16.msra.mxu0 %v433
    %455 = vmatpush.bf16.msra.mxu0 %v432
    %456 = vmatmul.bf16.gmra.mxu0 %v396
    %v457 = vpop.f32.mrf.mxu0
    %v458 = vadd.f32 %v398, %v457
    %v459 = vpop.f32.mrf.mxu0
    %v460 = vadd.f32 %v398, %v459
    %461 = vdwg.mxu0
    %v462 = vmul.f32 %v458, %v458
    %v463 = vmul.f32 %v460, %v460
    %v464 = vmul.f32 %v462, 0.035677407
    %v465 = vmul.f32 %v463, 0.035677407
    %v466 = vadd.f32 %v464, 0.7978846
    %v467 = vadd.f32 %v465, 0.7978846
    %v468 = vmul.f32 %v458, %v466
    %v469 = vmul.f32 %v460, %v467
    %v470 = vtanh.pop %v468
    %v471 = vtanh.pop %v469
    %v472 = vmul.f32 %v470, 0.5
    %v473 = vmul.f32 %v471, 0.5
    %v474 = vadd.f32 %v472, 0.5
    %v475 = vadd.f32 %v473, 0.5
    %v476 = vmul.f32 %v458, %v474
    %v477 = vmul.f32 %v460, %v475
    %478 = vst [vmem:[%s7] sm:$0xff] %v476
    %479 = vst [vmem:[%s7 + $0x8] sm:$0xff] %v477
    // Predicated region
    $region42: #{deep_neural_forward.1} parent=1 // pred_check
      _
    $region43: #{deep_neural_forward.1} parent=1 // pred_check_branch
      %481 = sbr.rel (0) target = $region45
    $region44: #{deep_neural_forward.1} parent=1 // pred_region
      _
    $region45: #{deep_neural_forward.1} parent=1 // pred_fallthru
      _
    // Predicated region
    $region46: #{deep_neural_forward.1} parent=1 // pred_check
      _
    $region47: #{deep_neural_forward.1} parent=1 // pred_check_branch
      %483 = sbr.rel (0) target = $region49
    $region48: #{deep_neural_forward.1} parent=1 // pred_region
      _
    $region49: #{deep_neural_forward.1} parent=1 // pred_fallthru
      _
    %484 = vsyncpa [#allocation3], 1
    %485 = vsyncpa [#allocation5], 1

</llo_original>
